<compile_context>
chip_gen: v5e
topology: v5e:2x2
jax: 0.10.0
libtpu: 0.0.40
codegen_flags: <defaults>
</compile_context>

<pallas_src>
import functools

import jax
import jax.numpy as jnp
from jax import lax
from jax.experimental import pallas as pl
from jax.experimental.pallas import tpu as pltpu

EPS = 1e-5          # nn.BatchNorm2d default eps
LANE = 128          # lane width; N / K padded to multiples of this


def _round_up(x, m):
    return (x + m - 1) // m * m


def _pick_tm(m):
    """Prefer large row tiles (these kernels are HBM-bound) but guarantee at
    least 2 grid programs along the row axis so both v7x TensorCores get work
    on small-M invocations.  Minimum 16 keeps bf16 (16,128) tiling legal."""
    for tm in (512, 256, 128, 64, 32, 16):
        if m >= 2 * tm:
            return tm
    return 16


def _compiler_params(block_nbytes):
    """vmem limit derived from the per-step block footprint (double-buffered),
    capped at v7x's 64 MiB physical VMEM per TensorCore."""
    need = 2 * block_nbytes
    limit = int(min(max(4 * need, 32 * 1024 * 1024), 64 * 1024 * 1024))
    return pltpu.CompilerParams(
        dimension_semantics=("parallel", "parallel"),
        vmem_limit_bytes=limit)


# ---------------------------------------------------------------------------
# Pallas kernels
# ---------------------------------------------------------------------------
def _gemm_stats_kernel(p_ref, w_ref, z_ref, st_ref):
    """z = patches @ W (bf16 MXU, f32 acc).  z is written back in bf16; the
    per-tile sum / sum-of-squares (rows 0 / 1 of the 8-row stats slab) are
    reduced from the f32 accumulator for the global BN statistics."""
    z = jnp.dot(p_ref[...], w_ref[...], preferred_element_type=jnp.float32)
    z_ref[...] = z.astype(z_ref.dtype)
    zsum = jnp.sum(z, axis=0, keepdims=True)         # (1, TN) f32
    zsq = jnp.sum(z * z, axis=0, keepdims=True)      # (1, TN) f32
    st_ref[0:1, :] = zsum
    st_ref[1:2, :] = zsq
    st_ref[2:8, :] = jnp.zeros((6, zsum.shape[-1]), jnp.float32)  # unused rows


def _bn_apply_kernel(z_ref, s_ref, t_ref, o_ref, *, relu):
    """y = z*scale + shift (folded BatchNorm), optional ReLU.  f32 math."""
    y = z_ref[...].astype(jnp.float32) * s_ref[...] + t_ref[...]
    if relu:
        y = jnp.maximum(y, 0.0)
    o_ref[...] = y.astype(o_ref.dtype)


def _bn_apply_add_relu_kernel(z_ref, s_ref, t_ref, r_ref, rs_ref, rt_ref, o_ref):
    """y = ReLU((z*scale + shift) + (r*rscale + rshift)) — main-branch BN,
    shortcut BN, residual add and final ReLU fused in one pass."""
    y = z_ref[...].astype(jnp.float32) * s_ref[...] + t_ref[...]
    res = r_ref[...].astype(jnp.float32) * rs_ref[...] + rt_ref[...]
    o_ref[...] = jnp.maximum(y + res, 0.0).astype(o_ref.dtype)


# ---------------------------------------------------------------------------
# pallas_call wrappers
# ---------------------------------------------------------------------------
def _gemm_with_stats(patches, w, tm):
    """patches: (Mpad, Kpad) bf16; w: (Kpad, Npad) bf16.
    Returns z (Mpad, Npad) bf16 and per-tile stats (grid_m*8, Npad) f32."""
    mpad, kpad = patches.shape
    _, npad = w.shape
    # TODO(synk): gate the 256-wide N tile on a get_tpu_info check; v5e's
    # 4x128^2 MXU gains nothing from it while doubling the store burst.
    tn = 256 if npad % 256 == 0 else LANE
    gm, gn = mpad // tm, npad // tn
    block_bytes = tm * kpad * 2 + kpad * tn * 2 + tm * tn * 2 + 8 * tn * 4
    z, stats = pl.pallas_call(
        _gemm_stats_kernel,
        grid=(gm, gn),
        in_specs=[
            pl.BlockSpec((tm, kpad), lambda i, j: (i, 0)),
            pl.BlockSpec((kpad, tn), lambda i, j: (0, j)),
        ],
        out_specs=(
            pl.BlockSpec((tm, tn), lambda i, j: (i, j)),
            pl.BlockSpec((8, tn), lambda i, j: (i, j)),
        ),
        out_shape=(
            jax.ShapeDtypeStruct((mpad, npad), jnp.bfloat16),
            jax.ShapeDtypeStruct((gm * 8, npad), jnp.float32),
        ),
        compiler_params=_compiler_params(block_bytes),
        cost_estimate=pl.CostEstimate(
            flops=2 * mpad * kpad * npad + 4 * mpad * npad,
            transcendentals=0,
            bytes_accessed=2 * (mpad * kpad + kpad * npad + mpad * npad)
                           + 4 * gm * 8 * npad),
    )(patches, w)
    return z, stats


def _bn_scale_shift(stats, m_true, gamma_pad, beta_pad):
    """Fold global batch statistics with gamma/beta into per-channel
    scale/shift (tiny reduction, done wrapper-side)."""
    npad = stats.shape[-1]
    st = stats.reshape(-1, 8, npad)
    mean = jnp.sum(st[:, 0, :], axis=0) / m_true
    # One-pass E[z^2] - mean^2, clamped; fine while conv outputs are ~zero-mean.
    var = jnp.maximum(jnp.sum(st[:, 1, :], axis=0) / m_true - mean * mean, 0.0)
    scale = gamma_pad * lax.rsqrt(var + EPS)
    shift = beta_pad - mean * scale
    return scale.reshape(1, npad), shift.reshape(1, npad)


def _bn_apply(z, scale, shift, tm, *, relu, out_dtype=jnp.bfloat16):
    mpad, npad = z.shape
    tn = 256 if npad % 256 == 0 else LANE
    gm, gn = mpad // tm, npad // tn
    zb = jnp.dtype(z.dtype).itemsize
    ob = jnp.dtype(out_dtype).itemsize
    block_bytes = tm * tn * (zb + ob) + 2 * tn * 4
    return pl.pallas_call(
        functools.partial(_bn_apply_kernel, relu=relu),
        grid=(gm, gn),
        in_specs=[
            pl.BlockSpec((tm, tn), lambda i, j: (i, j)),
            pl.BlockSpec((1, tn), lambda i, j: (0, j)),
            pl.BlockSpec((1, tn), lambda i, j: (0, j)),
        ],
        out_specs=pl.BlockSpec((tm, tn), lambda i, j: (i, j)),
        out_shape=jax.ShapeDtypeStruct((mpad, npad), out_dtype),
        compiler_params=_compiler_params(block_bytes),
        cost_estimate=pl.CostEstimate(
            flops=3 * mpad * npad, transcendentals=0,
            bytes_accessed=(zb + ob) * mpad * npad),
    )(z, scale, shift)


def _bn_apply_add_relu(z, scale, shift, r, rscale, rshift, tm):
    mpad, npad = z.shape
    tn = 256 if npad % 256 == 0 else LANE
    gm, gn = mpad // tm, npad // tn
    zb = jnp.dtype(z.dtype).itemsize
    rb = jnp.dtype(r.dtype).itemsize
    block_bytes = tm * tn * (zb + rb + 4) + 4 * tn * 4
    return pl.pallas_call(
        _bn_apply_add_relu_kernel,
        grid=(gm, gn),
        in_specs=[
            pl.BlockSpec((tm, tn), lambda i, j: (i, j)),
            pl.BlockSpec((1, tn), lambda i, j: (0, j)),
            pl.BlockSpec((1, tn), lambda i, j: (0, j)),
            pl.BlockSpec((tm, tn), lambda i, j: (i, j)),
            pl.BlockSpec((1, tn), lambda i, j: (0, j)),
            pl.BlockSpec((1, tn), lambda i, j: (0, j)),
        ],
        out_specs=pl.BlockSpec((tm, tn), lambda i, j: (i, j)),
        out_shape=jax.ShapeDtypeStruct((mpad, npad), jnp.float32),
        compiler_params=_compiler_params(block_bytes),
        cost_estimate=pl.CostEstimate(
            flops=6 * mpad * npad, transcendentals=0,
            bytes_accessed=(zb + rb + 4) * mpad * npad),
    )(z, scale, shift, r, rscale, rshift)


# ---------------------------------------------------------------------------
# Glue: im2col (pure JAX data movement, zero-padded + bf16 for the MXU)
# ---------------------------------------------------------------------------
def _im2col(x_nhwc, ksize, stride, pad, kpad, mpad):
    b, h, w, c = x_nhwc.shape
    xp = jnp.pad(x_nhwc, ((0, 0), (pad, pad), (pad, pad), (0, 0)))
    ho = (h + 2 * pad - ksize) // stride + 1
    wo = (w + 2 * pad - ksize) // stride + 1
    cols = []
    for kh in range(ksize):
        for kw in range(ksize):
            cols.append(xp[:, kh:kh + stride * ho:stride,
                           kw:kw + stride * wo:stride, :])
    patches = jnp.stack(cols, axis=3).reshape(b * ho * wo, ksize * ksize * c)
    m, k = patches.shape
    patches = jnp.pad(patches, ((0, mpad - m), (0, kpad - k)))
    return patches.astype(jnp.bfloat16), ho, wo


# ---------------------------------------------------------------------------
# ResidualBlock with deterministic synthetic parameters
# ---------------------------------------------------------------------------
class ResidualBlockPallas:
    def __init__(self, in_ch, out_ch, stride=1, key=None):
        if key is None:
            key = jax.random.PRNGKey(0)
        self.in_ch, self.out_ch, self.stride = in_ch, out_ch, stride
        self.has_proj = (stride != 1) or (in_ch != out_ch)
        self.npad = _round_up(out_ch, LANE)
        ks = jax.random.split(key, 9)
        f32 = jnp.float32

        # conv1 / bn1  (conv bias kept only for the reference — it cancels
        # exactly under training-mode BatchNorm, so the kernels skip it).
        self.w1 = 0.1 * jax.random.normal(ks[0], (3, 3, in_ch, out_ch), f32)  # HWIO
        self.b1 = 0.01 * jax.random.normal(ks[1], (out_ch,), f32)
        self.g1 = 1.0 + 0.1 * jax.random.normal(ks[2], (out_ch,), f32)
        self.be1 = 0.1 * jax.random.normal(ks[3], (out_ch,), f32)
        # conv2 / bn2
        self.w2 = 0.1 * jax.random.normal(ks[4], (3, 3, out_ch, out_ch), f32)
        self.b2 = 0.01 * jax.random.normal(ks[5], (out_ch,), f32)
        self.g2 = 1.0 + 0.1 * jax.random.normal(ks[6], (out_ch,), f32)
        self.be2 = 0.1 * jax.random.normal(ks[7], (out_ch,), f32)
        # shortcut (1x1 conv + bn) if needed
        if self.has_proj:
            ss = jax.random.split(ks[8], 4)
            self.ws = 0.1 * jax.random.normal(ss[0], (1, 1, in_ch, out_ch), f32)
            self.bs = 0.01 * jax.random.normal(ss[1], (out_ch,), f32)
            self.gs = 1.0 + 0.1 * jax.random.normal(ss[2], (out_ch,), f32)
            self.bes = 0.1 * jax.random.normal(ss[3], (out_ch,), f32)

        # Pre-padded, pre-cast kernel-side parameters (lane-dense, bf16 MXU).
        self.k1pad = _round_up(9 * in_ch, LANE)
        self.k2pad = _round_up(9 * out_ch, LANE)
        self.w1p = self._pad_w(self.w1.reshape(9 * in_ch, out_ch), self.k1pad)
        self.w2p = self._pad_w(self.w2.reshape(9 * out_ch, out_ch), self.k2pad)
        self.g1p, self.be1p = self._pad_v(self.g1), self._pad_v(self.be1)
        self.g2p, self.be2p = self._pad_v(self.g2), self._pad_v(self.be2)
        if self.has_proj:
            self.kspad = _round_up(in_ch, LANE)
            self.wsp = self._pad_w(self.ws.reshape(in_ch, out_ch), self.kspad)
            self.gsp, self.besp = self._pad_v(self.gs), self._pad_v(self.bes)

    def _pad_w(self, w2d, kpad):
        k, n = w2d.shape
        return jnp.pad(w2d, ((0, kpad - k), (0, self.npad - n))).astype(jnp.bfloat16)

    def _pad_v(self, v):
        return jnp.pad(v, (0, self.npad - v.shape[0]))

    def __call__(self, x_nchw):
        x = jnp.transpose(x_nchw, (0, 2, 3, 1)).astype(jnp.float32)   # NHWC
        b, h, w, c = x.shape
        npad = self.npad

        ho = (h + 2 - 3) // self.stride + 1
        wo = (w + 2 - 3) // self.stride + 1
        m = b * ho * wo                       # same M for conv1/conv2/shortcut
        tm = _pick_tm(m)
        mpad = _round_up(m, tm)

        # ---- conv1 (GEMM + stats) -> folded BN + ReLU (bf16 out1) ----------
        p1, _, _ = _im2col(x, 3, self.stride, 1, self.k1pad, mpad)
        z1, st1 = _gemm_with_stats(p1, self.w1p, tm)
        s1, t1 = _bn_scale_shift(st1, m, self.g1p, self.be1p)
        out1 = _bn_apply(z1, s1, t1, tm, relu=True)            # (mpad, npad) bf16

        # ---- conv2 (GEMM + stats) ------------------------------------------
        out1_img = out1[:m, :self.out_ch].reshape(b, ho, wo, self.out_ch)
        p2, _, _ = _im2col(out1_img, 3, 1, 1, self.k2pad, mpad)
        z2, st2 = _gemm_with_stats(p2, self.w2p, tm)
        s2, t2 = _bn_scale_shift(st2, m, self.g2p, self.be2p)

        # ---- shortcut branch -----------------------------------------------
        if self.has_proj:
            xs = x[:, ::self.stride, ::self.stride, :].reshape(m, c)
            xs = jnp.pad(xs, ((0, mpad - m), (0, self.kspad - c))).astype(jnp.bfloat16)
            zs, sts = _gemm_with_stats(xs, self.wsp, tm)
            rs, rt = _bn_scale_shift(sts, m, self.gsp, self.besp)
            r = zs                                             # bf16
        else:
            r = jnp.pad(x.reshape(m, c), ((0, mpad - m), (0, npad - c)))  # f32
            rs = jnp.ones((1, npad), jnp.float32)
            rt = jnp.zeros((1, npad), jnp.float32)

        # ---- bn2 + shortcut-bn + residual add + ReLU (one fused pass) ------
        out = _bn_apply_add_relu(z2, s2, t2, r, rs, rt, tm)
        out = out[:m, :self.out_ch].reshape(b, ho, wo, self.out_ch)
        return jnp.transpose(out, (0, 3, 1, 2))                # NHWC -> NCHW


# ---------------------------------------------------------------------------
# Pure-JAX reference (f32, HIGHEST precision, includes the conv bias)
# ---------------------------------------------------------------------------
def _ref_forward(blk, x_nchw):
    x = jnp.transpose(x_nchw, (0, 2, 3, 1))

    def conv(inp, w, bias, stride, pad):
        y = lax.conv_general_dilated(
            inp, w, (stride, stride), [(pad, pad), (pad, pad)],
            dimension_numbers=("NHWC", "HWIO", "NHWC"),
            precision=lax.Precision.HIGHEST)
        return y + bias

    def bn(y, g, be):
        mean = jnp.mean(y, axis=(0, 1, 2), keepdims=True)
        var = jnp.mean((y - mean) ** 2, axis=(0, 1, 2), keepdims=True)
        return (y - mean) * lax.rsqrt(var + EPS) * g + be

    out = jax.nn.relu(bn(conv(x, blk.w1, blk.b1, blk.stride, 1), blk.g1, blk.be1))
    out = bn(conv(out, blk.w2, blk.b2, 1, 1), blk.g2, blk.be2)
    if blk.has_proj:
        sc = bn(conv(x, blk.ws, blk.bs, blk.stride, 0), blk.gs, blk.bes)
    else:
        sc = x
    out = jax.nn.relu(out + sc)
    return jnp.transpose(out, (0, 3, 1, 2))


# ---------------------------------------------------------------------------
if __name__ == "__main__":
    key = jax.random.PRNGKey(0)
    kx, kp1, kp2 = jax.random.split(key, 3)

    # Tolerances account for bf16 MXU operands *and* bf16 storage of the
    # intermediates (z, out1); all BN statistics / epilogue math stay f32.
    ATOL = RTOL = 6e-2

    # Case 1: projection shortcut (stride=2, 4 -> 8 channels), NCHW (2, 4, 16, 16)
    x = jax.random.normal(kx, (2, 4, 16, 16), jnp.float32)
    blk = ResidualBlockPallas(4, 8, stride=2, key=kp1)
    out = jax.block_until_ready(blk(x))
    assert out.shape == (2, 8, 8, 8), out.shape
    ref = _ref_forward(blk, x)
    assert jnp.allclose(out, ref, atol=ATOL, rtol=RTOL), float(jnp.abs(out - ref).max())

    # Case 2: identity shortcut (stride=1, same channels), NCHW (2, 8, 16, 16)
    x2 = jax.random.normal(kx, (2, 8, 16, 16), jnp.float32)
    blk2 = ResidualBlockPallas(8, 8, stride=1, key=kp2)
    out2 = jax.block_until_ready(blk2(x2))
    assert out2.shape == (2, 8, 16, 16), out2.shape
    ref2 = _ref_forward(blk2, x2)
    assert jnp.allclose(out2, ref2, atol=ATOL, rtol=RTOL), float(jnp.abs(out2 - ref2).max())

    print("KERNEL_OK")
</pallas_src>

<mosaic_0001>
module attributes {stable_mosaic.version = 11 : i64} {
  func.func @_gemm_stats_kernel(%arg0: i32, %arg1: i32, %arg2: memref<64x128xbf16, #tpu.memory_space<vmem>>, %arg3: memref<128x128xbf16, #tpu.memory_space<vmem>>, %arg4: memref<64x128xbf16, #tpu.memory_space<vmem>>, %arg5: memref<8x128xf32, #tpu.memory_space<vmem>>) attributes {dimension_semantics = [#tpu.dimension_semantics<parallel>, #tpu.dimension_semantics<parallel>], iteration_bounds = array<i64: 2, 1>, scalar_prefetch = 0 : i64, scratch_operands = 0 : i64, tpu.core_type = #tpu.core_type<tc>, window_params = [{transform_indices = @transform_0, window_bounds = array<i64: 64, 128>}, {transform_indices = @transform_1, window_bounds = array<i64: 128, 128>}, {transform_indices = @transform_2, window_bounds = array<i64: 64, 128>}, {transform_indices = @transform_3, window_bounds = array<i64: 8, 128>}]} {
    %c0 = arith.constant 0 : index
    %c0_0 = arith.constant 0 : index
    %0 = vector.load %arg2[%c0, %c0_0] : memref<64x128xbf16, #tpu.memory_space<vmem>>, vector<64x128xbf16>
    %c0_1 = arith.constant 0 : index
    %c0_2 = arith.constant 0 : index
    %1 = vector.load %arg3[%c0_1, %c0_2] : memref<128x128xbf16, #tpu.memory_space<vmem>>, vector<128x128xbf16>
    %cst = arith.constant dense<0.000000e+00> : vector<64x128xf32>
    %2 = tpu.matmul %0, %1, %cst {dimension_numbers = #tpu.dot_dimension_numbers<[1], [0], [0], [1], [0, 0, 1, 1], [], []>} : vector<64x128xbf16>, vector<128x128xbf16>, vector<64x128xf32> -> vector<64x128xf32>
    %3 = arith.truncf %2 : vector<64x128xf32> to vector<64x128xbf16>
    %c0_3 = arith.constant 0 : index
    %c0_4 = arith.constant 0 : index
    %4 = vector.load %arg4[%c0_3, %c0_4] : memref<64x128xbf16, #tpu.memory_space<vmem>>, vector<64x128xbf16>
    tpu.vector_store %arg4[%c0_3, %c0_4], %3 {strides = array<i32>} : memref<64x128xbf16, #tpu.memory_space<vmem>>, vector<64x128xbf16>,
    %cst_5 = arith.constant dense<0.000000e+00> : vector<128xf32>
    %5 = vector.multi_reduction <add>, %2, %cst_5 [0] : vector<64x128xf32> to vector<128xf32>
    %6 = vector.shape_cast %5 : vector<128xf32> to vector<1x128xf32>
    %7 = arith.mulf %2, %2 : vector<64x128xf32>
    %cst_6 = arith.constant dense<0.000000e+00> : vector<128xf32>
    %8 = vector.multi_reduction <add>, %7, %cst_6 [0] : vector<64x128xf32> to vector<128xf32>
    %9 = vector.shape_cast %8 : vector<128xf32> to vector<1x128xf32>
    %c0_7 = arith.constant 0 : index
    %c0_8 = arith.constant 0 : index
    %10 = vector.load %arg5[%c0_7, %c0_8] : memref<8x128xf32, #tpu.memory_space<vmem>>, vector<1x128xf32>
    tpu.vector_store %arg5[%c0_7, %c0_8], %6 {strides = array<i32>} : memref<8x128xf32, #tpu.memory_space<vmem>>, vector<1x128xf32>,
    %c1 = arith.constant 1 : index
    %c0_9 = arith.constant 0 : index
    %11 = vector.load %arg5[%c1, %c0_9] : memref<8x128xf32, #tpu.memory_space<vmem>>, vector<1x128xf32>
    tpu.vector_store %arg5[%c1, %c0_9], %9 {strides = array<i32>} : memref<8x128xf32, #tpu.memory_space<vmem>>, vector<1x128xf32>,
    %cst_10 = arith.constant 0.000000e+00 : f32
    %12 = vector.broadcast %cst_10 : f32 to vector<6x128xf32>
    %c2 = arith.constant 2 : index
    %c0_11 = arith.constant 0 : index
    %13 = vector.load %arg5[%c2, %c0_11] : memref<8x128xf32, #tpu.memory_space<vmem>>, vector<6x128xf32>
    tpu.vector_store %arg5[%c2, %c0_11], %12 {strides = array<i32>} : memref<8x128xf32, #tpu.memory_space<vmem>>, vector<6x128xf32>,
    return
  }
  func.func @transform_0(%arg0: i32, %arg1: i32) -> (i32, i32) {
    %c0_i32 = arith.constant 0 : i32
    %c0_i32_0 = arith.constant 0 : i32
    return %arg0, %c0_i32 : i32, i32
  }
  func.func @transform_1(%arg0: i32, %arg1: i32) -> (i32, i32) {
    %c0_i32 = arith.constant 0 : i32
    %c0_i32_0 = arith.constant 0 : i32
    return %c0_i32, %arg1 : i32, i32
  }
  func.func @transform_2(%arg0: i32, %arg1: i32) -> (i32, i32) {
    %c0_i32 = arith.constant 0 : i32
    return %arg0, %arg1 : i32, i32
  }
  func.func @transform_3(%arg0: i32, %arg1: i32) -> (i32, i32) {
    %c0_i32 = arith.constant 0 : i32
    return %arg0, %arg1 : i32, i32
  }
}

</mosaic_0001>

<llo_original>
// kernel: tpu_custom_call.1
$region0: #{tpu_custom_call.1}
  #allocation0 [shape = 'u32[]', space=smem, size = 0x4, offset = 0x4, fixed_abs, tag = 'smem constant byte address 0x4 - core index']
  #allocation1 [shape = 'u32[72,128]{1,0:T(1,128)}', space=vmem, size = 0x9000, scoped, tag = 'internal scratch']
  %s0 = inlined_call_operand.hbm [shape: bf16[128,128], index: 0, kind: input, shape index: {}]
  %s1 = inlined_call_operand.hbm [shape: bf16[128,128], index: 1, kind: input, shape index: {}]
  %s2 = inlined_call_operand.hbm [shape: bf16[128,128], index: 2, kind: output, shape index: {0}]
  %s3 = inlined_call_operand.hbm [shape: f32[16,128], index: 3, kind: output, shape index: {1}]
  %4 = xla_tuple %s2, %s3
  %s5 = sld [smem:[#allocation0]]
  $region57: #{tpu_custom_call.1} parent=0
    _
  %s7 = ssub.s32 1, %s5
  %s8 = scalar_select 0, %s7, %s5
  $region1: #{tpu_custom_call.1} parent=0
    #allocation2 [shape = 'u8[32768]{0}', space=vmem, size = 0x8000, scoped, tag = 'input window, operand 0']
    #allocation3 [shape = 's32[2]{0}', space=sflag, size = 0x8, scoped, tag = 'scoped memory for tpu_custom_call.1']
    #allocation4 [shape = 's32[2]{0}', space=sflag, size = 0x8, scoped, tag = 'scoped memory for tpu_custom_call.1']
    #allocation5 [shape = 'u8[32768]{0}', space=vmem, size = 0x8000, scoped, tag = 'input window, operand 1, single buffered']
    #allocation6 [shape = 's32[1]{0}', space=sflag, size = 0x4, scoped, tag = 'scoped memory for tpu_custom_call.1']
    #allocation7 [shape = 'u8[32768]{0}', space=vmem, size = 0x8000, scoped, tag = 'output window, operand 0']
    #allocation8 [shape = 'u8[8192]{0}', space=vmem, size = 0x2000, scoped, tag = 'output window, operand 1']
    #allocation9 [shape = 's32[2]{0}', space=sflag, size = 0x8, scoped, tag = 'scoped memory for tpu_custom_call.1']
    %9 = vsyncpa [#allocation3], 0
    %s10 = scalar_lea.sflag [#allocation3], 1
    %11 = vsyncpa %s10, 0
    %12 = vsyncpa [#allocation6], 0
    %13 = vsyncpa [#allocation4], 0
    %s14 = scalar_lea.sflag [#allocation4], 1
    %15 = vsyncpa %s14, 0
    %16 = vsyncpa [#allocation9], 0
    %s17 = scalar_lea.sflag [#allocation9], 1
    %18 = vsyncpa %s17, 0
    loop: start=0, step=1, limit=4
    $region2: #{tpu_custom_call.1} parent=1 // loop_pre_header
      _
    $region3: #{tpu_custom_call.1} parent=1 // loop_header
      %s20 = sphi 0, %s24
      %p21 = scmp.ge.s32.totalorder %s20, 4
      %s27 = sphi 0, %s39
      %s28 = sphi 0, %s35
      %s29 = sphi 0, %s27
      %s30 = sphi 0, %s28
      %s31 = sphi 0, %s29
      %s32 = sphi 0, %s30
      %s42 = sphi 0, %s44
      %s45 = sphi 0, %s42
      %s46 = sphi 0, %s45
      %s62 = sphi 0, %s46
      %s68 = sphi 0, %s70
      %s71 = sphi 0, %s68
      %s72 = sphi 0, %s71
      %s88 = sphi 0, %s72
      %s96 = sphi 0, %s98
      %s99 = sphi 0, %s96
      %s100 = sphi 0, %s99
      %s116 = sphi 0, %s100
      %s124 = sphi 0, %s126
      %s127 = sphi 0, %s124
      %s128 = sphi 0, %s127
      %s144 = sphi 0, %s128
    $region4: #{tpu_custom_call.1} parent=1 // loop_header_branch
      %23 = sbr.rel (%p21) target = $region8
    $region5: #{tpu_custom_call.1} parent=1 // loop_body
      %s25 = ssub.s32 %s20, 1
      %s26 = ssub.s32 %s20, 2
      %s33 = sadd.s32 1, %s28
      %p34 = scmp.ge.s32.totalorder %s33, 1
      %s35 = scalar_select %p34, 0, %s33
      %s36 = sadd.s32 1, %s27
      %s37 = scalar_select %p34, %s36, %s27
      %p38 = scmp.ge.s32.totalorder %s37, 2
      %s39 = scalar_select %p38, 0, %s37
      %s40 = ssub.s32 %s27, %s39
      %p41 = scmp.eq.s32.totalorder %s40, 0
      %s43 = sadd.s32 %s42, 1
      %s44 = scalar_select %p41, %s42, %s43
      %p47 = pneg %p41
      %p48 = scmp.eq.s32.totalorder %s20, 1
      %p49 = por %p47, %p48
      %p50 = scmp.ne.s32.totalorder %s42, %s45
      %p51 = scmp.eq.s32.totalorder %s20, 0
      %p52 = por %p50, %p51
      %p53 = scmp.ne.s32.totalorder %s42, %s45
      %p54 = scmp.eq.s32.totalorder %s25, 1
      %p55 = por %p53, %p54
      %p56 = scmp.ne.s32.totalorder %s45, %s46
      %p57 = scmp.eq.s32.totalorder %s25, 0
      %p58 = por %p56, %p57
      %p59 = scmp.ne.s32.totalorder %s45, %s46
      %p60 = scmp.eq.s32.totalorder %s26, 1
      %p61 = por %p59, %p60
      %p63 = scmp.ne.s32.totalorder %s46, %s62
      %p64 = scmp.eq.s32.totalorder %s26, 0
      %p65 = por %p63, %p64
      %s66 = ssub.s32 %s28, %s35
      %p67 = scmp.eq.s32.totalorder %s66, 0
      %s69 = sadd.s32 %s68, 1
      %s70 = scalar_select %p67, %s68, %s69
      %p73 = pneg %p67
      %p74 = scmp.eq.s32.totalorder %s20, 1
      %p75 = por %p73, %p74
      %p76 = scmp.ne.s32.totalorder %s68, %s71
      %p77 = scmp.eq.s32.totalorder %s20, 0
      %p78 = por %p76, %p77
      %p79 = scmp.ne.s32.totalorder %s68, %s71
      %p80 = scmp.eq.s32.totalorder %s25, 1
      %p81 = por %p79, %p80
      %p82 = scmp.ne.s32.totalorder %s71, %s72
      %p83 = scmp.eq.s32.totalorder %s25, 0
      %p84 = por %p82, %p83
      %p85 = scmp.ne.s32.totalorder %s71, %s72
      %p86 = scmp.eq.s32.totalorder %s26, 1
      %p87 = por %p85, %p86
      %p89 = scmp.ne.s32.totalorder %s72, %s88
      %p90 = scmp.eq.s32.totalorder %s26, 0
      %p91 = por %p89, %p90
      %s92 = ssub.s32 %s27, %s39
      %s93 = ssub.s32 %s28, %s35
      %s94 = sor.u32 %s92, %s93
      %p95 = scmp.eq.s32.totalorder %s94, 0
      %s97 = sadd.s32 %s96, 1
      %s98 = scalar_select %p95, %s96, %s97
      %p101 = pneg %p95
      %p102 = scmp.eq.s32.totalorder %s20, 1
      %p103 = por %p101, %p102
      %p104 = scmp.ne.s32.totalorder %s96, %s99
      %p105 = scmp.eq.s32.totalorder %s20, 0
      %p106 = por %p104, %p105
      %p107 = scmp.ne.s32.totalorder %s96, %s99
      %p108 = scmp.eq.s32.totalorder %s25, 1
      %p109 = por %p107, %p108
      %p110 = scmp.ne.s32.totalorder %s99, %s100
      %p111 = scmp.eq.s32.totalorder %s25, 0
      %p112 = por %p110, %p111
      %p113 = scmp.ne.s32.totalorder %s99, %s100
      %p114 = scmp.eq.s32.totalorder %s26, 1
      %p115 = por %p113, %p114
      %p117 = scmp.ne.s32.totalorder %s100, %s116
      %p118 = scmp.eq.s32.totalorder %s26, 0
      %p119 = por %p117, %p118
      %s120 = ssub.s32 %s27, %s39
      %s121 = ssub.s32 %s28, %s35
      %s122 = sor.u32 %s120, %s121
      %p123 = scmp.eq.s32.totalorder %s122, 0
      %s125 = sadd.s32 %s124, 1
      %s126 = scalar_select %p123, %s124, %s125
      %p129 = pneg %p123
      %p130 = scmp.eq.s32.totalorder %s20, 1
      %p131 = por %p129, %p130
      %p132 = scmp.ne.s32.totalorder %s124, %s127
      %p133 = scmp.eq.s32.totalorder %s20, 0
      %p134 = por %p132, %p133
      %p135 = scmp.ne.s32.totalorder %s124, %s127
      %p136 = scmp.eq.s32.totalorder %s25, 1
      %p137 = por %p135, %p136
      %p138 = scmp.ne.s32.totalorder %s127, %s128
      %p139 = scmp.eq.s32.totalorder %s25, 0
      %p140 = por %p138, %p139
      %p141 = scmp.ne.s32.totalorder %s127, %s128
      %p142 = scmp.eq.s32.totalorder %s26, 1
      %p143 = por %p141, %p142
      %p145 = scmp.ne.s32.totalorder %s128, %s144
      %p146 = scmp.eq.s32.totalorder %s26, 0
      %p147 = por %p145, %p146
      %p148 = scmp.le.s32.totalorder 1, %s20
      %p149 = scmp.lt.s32.totalorder %s20, 3
      %p150 = pnand %p148, %p149
      %p151 = pneg %p150
      // Predicated region
      $region9: #{tpu_custom_call.1} parent=5 // pred_check
        _
      $region10: #{tpu_custom_call.1} parent=5 // pred_check_branch
        %153 = sbr.rel (%p150) target = $region12
      $region11: #{tpu_custom_call.1} parent=5 // pred_region
        %s154 = ssub.s32 %s20, 1
        // Predicated region
        $region13: #{tpu_custom_call.1} parent=11 // pred_check
          %p155 = pneg %p84
        $region14: #{tpu_custom_call.1} parent=11 // pred_check_branch
          %157 = sbr.rel (%p155) target = $region16
        $region15: #{tpu_custom_call.1} parent=11 // pred_region
          %159 = vsyncadd [#allocation6], 0
          %s160 = smul.addr %s30, 4
          %s161 = scalar_lea.hbm %s1, %s160
          %s162 = sshll.u32 %s161, 4
          %s163 = int_to_ptr.hbm [resolvable:$true] %s162
          %s164 = sshll.u32 [#allocation5], 4
          %s165 = int_to_ptr.vmem [resolvable:$true] %s164
          %170 = dma.hbm_to_vmem [thread:$0]  %s163, 1024, %s165, [#allocation6], 64, 64, 4
        $region16: #{tpu_custom_call.1} parent=11 // pred_fallthru
          _
      $region12: #{tpu_custom_call.1} parent=5 // pred_fallthru
        _
      %p171 = scmp.lt.s32.totalorder %s20, 2
      // Predicated region
      $region17: #{tpu_custom_call.1} parent=5 // pred_check
        %p172 = pneg %p171
      $region18: #{tpu_custom_call.1} parent=5 // pred_check_branch
        %174 = sbr.rel (%p172) target = $region20
      $region19: #{tpu_custom_call.1} parent=5 // pred_region
        // Predicated region
        $region21: #{tpu_custom_call.1} parent=19 // pred_check
          %p175 = pneg %p52
        $region22: #{tpu_custom_call.1} parent=19 // pred_check_branch
          %177 = sbr.rel (%p175) target = $region24
        $region23: #{tpu_custom_call.1} parent=19 // pred_region
          %s178 = sand.u32 %s42, 1
          %s179 = scalar_lea.sflag [#allocation3], %s178
          %s180 = sand.u32 %s42, 1
          %s181 = smul.addr %s180, 32
          %s182 = scalar_lea.vmem [#allocation2], %s181
          %s183 = smul.u32 8, %s27
          %185 = vsyncadd %s179, 0
          %s186 = smul.addr %s183, 4
          %s187 = scalar_lea.hbm %s0, %s186
          %s188 = sshll.u32 %s187, 4
          %s189 = int_to_ptr.hbm [resolvable:$true] %s188
          %s190 = sshll.u32 %s182, 4
          %s191 = int_to_ptr.vmem [resolvable:$true] %s190
          %196 = dma.hbm_to_vmem [thread:$0]  %s189, 512, %s191, %s179, 64, 64, 4
        $region24: #{tpu_custom_call.1} parent=19 // pred_fallthru
          _
      $region20: #{tpu_custom_call.1} parent=5 // pred_fallthru
        _
      %p197 = scmp.le.s32.totalorder 1, %s20
      %p198 = scmp.lt.s32.totalorder %s20, 3
      %p199 = pnand %p197, %p198
      %p200 = pneg %p199
      // Predicated region
      $region25: #{tpu_custom_call.1} parent=5 // pred_check
        _
      $region26: #{tpu_custom_call.1} parent=5 // pred_check_branch
        %202 = sbr.rel (%p199) target = $region28
      $region27: #{tpu_custom_call.1} parent=5 // pred_region
        %s203 = ssub.s32 %s20, 1
        %s204 = sand.u32 %s45, 1
        %s205 = scalar_lea.sflag [#allocation3], %s204
        %s206 = sand.u32 %s45, 1
        %s207 = smul.addr %s206, 32
        %s208 = scalar_lea.vmem [#allocation2], %s207
        // Predicated region
        $region29: #{tpu_custom_call.1} parent=27 // pred_check
          %p209 = pneg %p58
        $region30: #{tpu_custom_call.1} parent=27 // pred_check_branch
          %211 = sbr.rel (%p209) target = $region32
        $region31: #{tpu_custom_call.1} parent=27 // pred_region
          %213 = dma.done %s205, 512
        $region32: #{tpu_custom_call.1} parent=27 // pred_fallthru
          _
        // Predicated region
        $region33: #{tpu_custom_call.1} parent=27 // pred_check
          %p214 = pneg %p84
        $region34: #{tpu_custom_call.1} parent=27 // pred_check_branch
          %216 = sbr.rel (%p214) target = $region36
        $region35: #{tpu_custom_call.1} parent=27 // pred_region
          %218 = dma.done [#allocation6], 1024
        $region36: #{tpu_custom_call.1} parent=27 // pred_fallthru
          _
        %s219 = sand.u32 %s45, 1
        %s220 = scalar_lea.sflag [#allocation3], %s219
        %s221 = sand.u32 %s45, 1
        %s222 = smul.addr %s221, 32
        %s223 = scalar_lea.vmem [#allocation2], %s222
        %p224 = pneg %p58
        %p225 = pneg %p55
        %p226 = pneg %p84
        %p227 = pneg %p81
        %p228 = pneg %p112
        %p229 = pneg %p109
        %s230 = sand.u32 %s99, 1
        %s231 = scalar_lea.sflag [#allocation4], %s230
        %s232 = sand.u32 %s99, 1
        %s233 = smul.addr %s232, 32
        %s234 = scalar_lea.vmem [#allocation7], %s233
        %p235 = pneg %p140
        %p236 = pneg %p137
        %s237 = sand.u32 %s127, 1
        %s238 = scalar_lea.sflag [#allocation9], %s237
        %s239 = sand.u32 %s127, 1
        %s240 = smul.addr %s239, 8
        %s241 = scalar_lea.vmem [#allocation8], %s240
        %s242 = smul.u32 8, %s29
        %s243 = smul.u32 8, %s29
        %v244 = vld [vmem:[%s208] sm:$0xf]
        %v245 = vld [vmem:[%s208 + $0x4] sm:$0xf]
        %v246 = vld [vmem:[%s208 + $0x8] sm:$0xf]
        %v247 = vld [vmem:[%s208 + $0xc] sm:$0xf]
        %v248 = vld [vmem:[%s208 + $0x10] sm:$0xf]
        %v249 = vld [vmem:[%s208 + $0x14] sm:$0xf]
        %v250 = vld [vmem:[%s208 + $0x18] sm:$0xf]
        %v251 = vld [vmem:[%s208 + $0x1c] sm:$0xf]
        %v252 = vld [vmem:[#allocation5] sm:$0xf]
        %v253 = vld [vmem:[#allocation5 + $0x4] sm:$0xf]
        %v254 = vld [vmem:[#allocation5 + $0x8] sm:$0xf]
        %v255 = vld [vmem:[#allocation5 + $0xc] sm:$0xf]
        %v256 = vld [vmem:[#allocation5 + $0x10] sm:$0xf]
        %v257 = vld [vmem:[#allocation5 + $0x14] sm:$0xf]
        %v258 = vld [vmem:[#allocation5 + $0x18] sm:$0xf]
        %v259 = vld [vmem:[#allocation5 + $0x1c] sm:$0xf]
        %v260 = vld [vmem:[#allocation5 + $0x20] sm:$0xf]
        %v261 = vld [vmem:[#allocation5 + $0x24] sm:$0xf]
        %v262 = vld [vmem:[#allocation5 + $0x28] sm:$0xf]
        %v263 = vld [vmem:[#allocation5 + $0x2c] sm:$0xf]
        %v264 = vld [vmem:[#allocation5 + $0x30] sm:$0xf]
        %v265 = vld [vmem:[#allocation5 + $0x34] sm:$0xf]
        %v266 = vld [vmem:[#allocation5 + $0x38] sm:$0xf]
        %v267 = vld [vmem:[#allocation5 + $0x3c] sm:$0xf]
        %v276 = vunpack.c.l.b16 %v244
        %v277 = vunpack.c.l.b16 %v245
        %v278 = vunpack.c.l.b16 %v246
        %v279 = vunpack.c.l.b16 %v247
        %v280 = vunpack.c.l.b16 %v248
        %v281 = vunpack.c.l.b16 %v249
        %v282 = vunpack.c.l.b16 %v250
        %v283 = vunpack.c.l.b16 %v251
        %v284 = vpack.c.b16 %v277, %v276
        %v285 = vpack.c.b16 %v279, %v278
        %v286 = vpack.c.b16 %v281, %v280
        %v287 = vpack.c.b16 %v283, %v282
        %v308 = vunpack.c.l.b16 %v252
        %v309 = vunpack.c.l.b16 %v253
        %v310 = vunpack.c.l.b16 %v254
        %v311 = vunpack.c.l.b16 %v255
        %v312 = vunpack.c.l.b16 %v256
        %v313 = vunpack.c.l.b16 %v257
        %v314 = vunpack.c.l.b16 %v258
        %v315 = vunpack.c.l.b16 %v259
        %v316 = vunpack.c.l.b16 %v260
        %v317 = vunpack.c.l.b16 %v261
        %v318 = vunpack.c.l.b16 %v262
        %v319 = vunpack.c.l.b16 %v263
        %v320 = vunpack.c.l.b16 %v264
        %v321 = vunpack.c.l.b16 %v265
        %v322 = vunpack.c.l.b16 %v266
        %v323 = vunpack.c.l.b16 %v267
        %v324 = vpack.c.b16 %v309, %v308
        %v325 = vpack.c.b16 %v311, %v310
        %v326 = vpack.c.b16 %v313, %v312
        %v327 = vpack.c.b16 %v315, %v314
        %v328 = vpack.c.b16 %v317, %v316
        %v329 = vpack.c.b16 %v319, %v318
        %v330 = vpack.c.b16 %v321, %v320
        %v331 = vpack.c.b16 %v323, %v322
        %340 = vmatpush.bf16.msra.mxu0 %v331
        %341 = vmatpush.bf16.msra.mxu0 %v330
        %342 = vmatpush.bf16.msra.mxu0 %v329
        %343 = vmatpush.bf16.msra.mxu0 %v328
        %344 = vmatpush.bf16.msra.mxu0 %v327
        %345 = vmatpush.bf16.msra.mxu0 %v326
        %346 = vmatpush.bf16.msra.mxu0 %v325
        %347 = vmatpush.bf16.msra.mxu0 %v324
        %348 = vmatmul.bf16.gmra.mxu0 %v284
        %v349 = vpop.f32.mrf.mxu0
        %v350 = vadd.f32 0.0, %v349
        %v351 = vpop.f32.mrf.mxu0
        %v352 = vadd.f32 0.0, %v351
        %353 = vmatmul.bf16.gmra.mxu0 %v285
        %v354 = vpop.f32.mrf.mxu0
        %v355 = vadd.f32 0.0, %v354
        %v356 = vpop.f32.mrf.mxu0
        %v357 = vadd.f32 0.0, %v356
        %358 = vmatmul.bf16.gmra.mxu0 %v286
        %v359 = vpop.f32.mrf.mxu0
        %v360 = vadd.f32 0.0, %v359
        %v361 = vpop.f32.mrf.mxu0
        %v362 = vadd.f32 0.0, %v361
        %363 = vmatmul.bf16.gmra.mxu0 %v287
        %v364 = vpop.f32.mrf.mxu0
        %v365 = vadd.f32 0.0, %v364
        %v366 = vpop.f32.mrf.mxu0
        %v367 = vadd.f32 0.0, %v366
        %368 = vdwg.mxu0
        %v369 = vpack.c.bf16 %v350, %v350
        %v370 = vpack.c.bf16 %v352, %v352
        %v371 = vpack.c.bf16 %v355, %v355
        %v372 = vpack.c.bf16 %v357, %v357
        %v373 = vpack.c.bf16 %v360, %v360
        %v374 = vpack.c.bf16 %v362, %v362
        %v375 = vpack.c.bf16 %v365, %v365
        %v376 = vpack.c.bf16 %v367, %v367
        %377 = vst [vmem:[%s234] sm:$0xf] %v369
        %378 = vst [vmem:[%s234 + $0x4] sm:$0xf] %v370
        %379 = vst [vmem:[%s234 + $0x8] sm:$0xf] %v371
        %380 = vst [vmem:[%s234 + $0xc] sm:$0xf] %v372
        %381 = vst [vmem:[%s234 + $0x10] sm:$0xf] %v373
        %382 = vst [vmem:[%s234 + $0x14] sm:$0xf] %v374
        %383 = vst [vmem:[%s234 + $0x18] sm:$0xf] %v375
        %384 = vst [vmem:[%s234 + $0x1c] sm:$0xf] %v376
        %v385 = vadd.f32 %v350, %v352
        %v386 = vadd.f32 %v385, %v355
        %v387 = vadd.f32 %v386, %v357
        %v388 = vadd.f32 %v387, %v360
        %v389 = vadd.f32 %v388, %v362
        %v390 = vadd.f32 %v389, %v365
        %v391 = vadd.f32 %v390, %v367
        %v392 = vrot.slane %v391, 4
        %v393 = vadd.f32 %v391, %v392
        %v394 = vrot.slane %v393, 2
        %v395 = vadd.f32 %v393, %v394
        %v396 = vrot.slane %v395, 1
        %v397 = vadd.f32 %v395, %v396
        %v398 = vmul.f32 %v350, %v350
        %v399 = vmul.f32 %v352, %v352
        %v400 = vmul.f32 %v355, %v355
        %v401 = vmul.f32 %v357, %v357
        %v402 = vmul.f32 %v360, %v360
        %v403 = vmul.f32 %v362, %v362
        %v404 = vmul.f32 %v365, %v365
        %v405 = vmul.f32 %v367, %v367
        %v406 = vadd.f32 %v398, %v399
        %v407 = vadd.f32 %v406, %v400
        %v408 = vadd.f32 %v407, %v401
        %v409 = vadd.f32 %v408, %v402
        %v410 = vadd.f32 %v409, %v403
        %v411 = vadd.f32 %v410, %v404
        %v412 = vadd.f32 %v411, %v405
        %v413 = vrot.slane %v412, 4
        %v414 = vadd.f32 %v412, %v413
        %v415 = vrot.slane %v414, 2
        %v416 = vadd.f32 %v414, %v415
        %v417 = vrot.slane %v416, 1
        %v418 = vadd.f32 %v416, %v417
        %419 = vst [vmem:[%s241] sm:$0x1] %v397
        %420 = vst [vmem:[%s241 + $0x1] sm:$0x1] %v418
        %421 = vst [vmem:[%s241 + $0x2] sm:$0x3f] 0.0
        %s422 = sand.u32 %s99, 1
        %s423 = scalar_lea.sflag [#allocation4], %s422
        %s424 = sand.u32 %s99, 1
        %s425 = smul.addr %s424, 32
        %s426 = scalar_lea.vmem [#allocation7], %s425
        %s427 = sand.u32 %s127, 1
        %s428 = scalar_lea.sflag [#allocation9], %s427
        %s429 = sand.u32 %s127, 1
        %s430 = smul.addr %s429, 8
        %s431 = scalar_lea.vmem [#allocation8], %s430
        // Predicated region
        $region37: #{tpu_custom_call.1} parent=27 // pred_check
          %p432 = pneg %p109
        $region38: #{tpu_custom_call.1} parent=27 // pred_check_branch
          %434 = sbr.rel (%p432) target = $region40
        $region39: #{tpu_custom_call.1} parent=27 // pred_region
          %s435 = smul.u32 8, %s29
          %437 = vsyncadd %s423, 0
          %s438 = sadd.s32 %s30, %s435
          %s439 = smul.addr %s438, 4
          %s440 = scalar_lea.hbm %s2, %s439
          %s441 = sshll.u32 %s426, 4
          %s442 = int_to_ptr.vmem [resolvable:$true] %s441
          %s443 = sshll.u32 %s440, 4
          %s444 = int_to_ptr.hbm [resolvable:$true] %s443
          %449 = dma.vmem_to_hbm [thread:$0]  %s442, 512, %s444, %s423, 64, 64, 4
        $region40: #{tpu_custom_call.1} parent=27 // pred_fallthru
          _
        // Predicated region
        $region41: #{tpu_custom_call.1} parent=27 // pred_check
          %p450 = pneg %p137
        $region42: #{tpu_custom_call.1} parent=27 // pred_check_branch
          %452 = sbr.rel (%p450) target = $region44
        $region43: #{tpu_custom_call.1} parent=27 // pred_region
          %454 = vsyncadd %s428, 0
          %s455 = sadd.s32 %s30, %s29
          %s456 = smul.addr %s455, 8
          %s457 = scalar_lea.hbm %s3, %s456
          %s459 = sshll.u32 %s431, 4
          %s460 = int_to_ptr.vmem [resolvable:$true] %s459
          %s461 = sshll.u32 %s457, 4
          %s462 = int_to_ptr.hbm [resolvable:$true] %s461
          %464 = dma.vmem_to_hbm [thread:$0]  %s460, 128, %s462, %s428
        $region44: #{tpu_custom_call.1} parent=27 // pred_fallthru
          _
      $region28: #{tpu_custom_call.1} parent=5 // pred_fallthru
        _
      %p465 = scmp.le.s32.totalorder 2, %s20
      // Predicated region
      $region45: #{tpu_custom_call.1} parent=5 // pred_check
        %p466 = pneg %p465
      $region46: #{tpu_custom_call.1} parent=5 // pred_check_branch
        %468 = sbr.rel (%p466) target = $region48
      $region47: #{tpu_custom_call.1} parent=5 // pred_region
        %s469 = ssub.s32 %s20, 2
        // Predicated region
        $region49: #{tpu_custom_call.1} parent=47 // pred_check
          %p470 = pneg %p115
        $region50: #{tpu_custom_call.1} parent=47 // pred_check_branch
          %472 = sbr.rel (%p470) target = $region52
        $region51: #{tpu_custom_call.1} parent=47 // pred_region
          %s473 = sand.u32 %s100, 1
          %s474 = scalar_lea.sflag [#allocation4], %s473
          %s475 = sand.u32 %s100, 1
          %s476 = smul.addr %s475, 32
          %s477 = scalar_lea.vmem [#allocation7], %s476
          %479 = dma.done %s474, 512
        $region52: #{tpu_custom_call.1} parent=47 // pred_fallthru
          _
        // Predicated region
        $region53: #{tpu_custom_call.1} parent=47 // pred_check
          %p480 = pneg %p143
        $region54: #{tpu_custom_call.1} parent=47 // pred_check_branch
          %482 = sbr.rel (%p480) target = $region56
        $region55: #{tpu_custom_call.1} parent=47 // pred_region
          %s483 = sand.u32 %s128, 1
          %s484 = scalar_lea.sflag [#allocation9], %s483
          %s485 = sand.u32 %s128, 1
          %s486 = smul.addr %s485, 8
          %s487 = scalar_lea.vmem [#allocation8], %s486
          %489 = dma.done %s484, 128
        $region56: #{tpu_custom_call.1} parent=47 // pred_fallthru
          _
      $region48: #{tpu_custom_call.1} parent=5 // pred_fallthru
        _
    $region6: #{tpu_custom_call.1} parent=1 // loop_footer
      %s24 = sadd.s32 1, %s20
    $region7: #{tpu_custom_call.1} parent=1 // loop_footer_branch
      %19 = sbr.rel target = $region3
    $region8: #{tpu_custom_call.1} parent=1 // loop_exit
      _
    %490 = vsyncpa [#allocation3], 1
    %s491 = scalar_lea.sflag [#allocation3], 1
    %492 = vsyncpa %s491, 1
    %493 = vsyncpa [#allocation6], 1
    %494 = vsyncpa [#allocation4], 1
    %s495 = scalar_lea.sflag [#allocation4], 1
    %496 = vsyncpa %s495, 1
    %497 = vsyncpa [#allocation9], 1
    %s498 = scalar_lea.sflag [#allocation9], 1
    %499 = vsyncpa %s498, 1

</llo_original>
